<compile_context>
chip_gen: v5e
topology: v5e:2x2
jax: 0.10.0
libtpu: 0.0.40
codegen_flags: <defaults>
</compile_context>

<pallas_src>
import functools

import jax
import jax.numpy as jnp
from jax.experimental import pallas as pl
from jax.experimental.pallas import tpu as pltpu


def _fused_kernel(xs_ref, w_ref, b_ref, o_ref):
    # xs_ref: [B, 2D]   w_ref: [2, 2D, 2D]   b_ref: [1, 2D]   o_ref: [B, D]
    xs = xs_ref[...]

    # Matmul 1: t[:, :D] = h1 + h2 (bias included), t[:, D:] = h1
    t = jnp.dot(xs, w_ref[0], preferred_element_type=jnp.float32) + b_ref[...]

    # Matmul 2: out[:, :D] = 2*h3 + h1, out[:, D:] = 0 (zero-padded weight cols)
    out = jnp.dot(t, w_ref[1], preferred_element_type=jnp.float32)

    o_ref[...] = out[:, : o_ref.shape[1]].astype(o_ref.dtype)


def pack_params(w1, w2, b2, w3):
    """One-time parameter packing (amortized across all forward calls).

    w1, w2, w3: [out, in] (PyTorch Linear convention); b2: [out].
    """
    D = w1.shape[0]
    dt = w1.dtype
    z = jnp.zeros((D, D), dt)
    eye = jnp.eye(D, dtype=dt)

    # First fused matmul weights: [x1|x2] @ wa -> [h1+h2 | h1]
    wa = jnp.block([[w1.T, w1.T],
                    [w2.T, z]])                       # [2D, 2D]
    # Second fused matmul weights: [h1+h2 | h1] @ wb -> [h1 + 2*h3 | 0]
    wb = jnp.block([[2.0 * w3.T, z],
                    [eye, z]])                        # [2D, 2D]
    w_pack = jnp.stack([wa, wb], axis=0)              # [2, 2D, 2D]

    # Bias only applies to the (h1 + h2) half of t.
    b_pack = jnp.concatenate([b2, jnp.zeros((D,), b2.dtype)]).reshape(1, 2 * D)
    return w_pack, b_pack


def model_forward(x1, x2, w_pack, b_pack):
    """x1, x2: [B, D]; w_pack: [2, 2D, 2D]; b_pack: [1, 2D] (from pack_params)."""
    B, D = x1.shape
    xs = jnp.concatenate([x1, x2], axis=1)            # [B, 2D] -> single input DMA

    vmem_spec = functools.partial(pl.BlockSpec, memory_space=pltpu.MemorySpace.VMEM)
    return pl.pallas_call(
        _fused_kernel,
        out_shape=jax.ShapeDtypeStruct((B, D), x1.dtype),
        in_specs=[vmem_spec(), vmem_spec(), vmem_spec()],
        out_specs=vmem_spec(),
    )(xs, w_pack, b_pack)


def _reference(x1, x2, w1, w2, b2, w3):
    h1 = x1 @ w1.T
    h2 = x2 @ w2.T + b2
    h3 = (h1 + h2) @ w3.T
    return h1 + h3 + h3


if __name__ == "__main__":
    key = jax.random.PRNGKey(0)
    k_x1, k_x2, k_w1, k_w2, k_b2, k_w3 = jax.random.split(key, 6)

    B, D = 5, 10
    x1 = jax.random.normal(k_x1, (B, D), dtype=jnp.float32)
    x2 = jax.random.normal(k_x2, (B, D), dtype=jnp.float32)

    # Deterministic parameter init (Linear(10, 10) -> weight [out, in]).
    bound = 1.0 / (D ** 0.5)
    w1 = jax.random.uniform(k_w1, (D, D), minval=-bound, maxval=bound, dtype=jnp.float32)
    w2 = jax.random.uniform(k_w2, (D, D), minval=-bound, maxval=bound, dtype=jnp.float32)
    b2 = jax.random.uniform(k_b2, (D,), minval=-bound, maxval=bound, dtype=jnp.float32)
    w3 = jax.random.uniform(k_w3, (D, D), minval=-bound, maxval=bound, dtype=jnp.float32)

    # One-time packing (kept outside the per-call path).
    w_pack, b_pack = pack_params(w1, w2, b2, w3)
    w_pack, b_pack = jax.block_until_ready((w_pack, b_pack))

    out = model_forward(x1, x2, w_pack, b_pack)
    jax.block_until_ready(out)

    ref = _reference(x1, x2, w1, w2, b2, w3)
    assert out.shape == (B, D), out.shape
    assert jnp.allclose(out, ref, atol=1e-5, rtol=1e-5), "mismatch vs reference"

    print("KERNEL_OK")
</pallas_src>

<mosaic_0001>
module attributes {stable_mosaic.version = 11 : i64} {
  func.func @_fused_kernel(%arg0: memref<5x20xf32, #tpu.memory_space<vmem>>, %arg1: memref<2x20x20xf32, #tpu.memory_space<vmem>>, %arg2: memref<1x20xf32, #tpu.memory_space<vmem>>, %arg3: memref<5x10xf32, #tpu.memory_space<vmem>>) attributes {dimension_semantics = [], scalar_prefetch = 0 : i64, scratch_operands = 0 : i64, tpu.core_type = #tpu.core_type<tc>} {
    %c0 = arith.constant 0 : index
    %c0_0 = arith.constant 0 : index
    %0 = vector.load %arg0[%c0, %c0_0] : memref<5x20xf32, #tpu.memory_space<vmem>>, vector<5x20xf32>
    %c0_1 = arith.constant 0 : index
    %c0_2 = arith.constant 0 : index
    %c0_3 = arith.constant 0 : index
    %1 = vector.load %arg1[%c0_1, %c0_2, %c0_3] : memref<2x20x20xf32, #tpu.memory_space<vmem>>, vector<1x20x20xf32>
    %2 = vector.shape_cast %1 : vector<1x20x20xf32> to vector<20x20xf32>
    %cst = arith.constant dense<0.000000e+00> : vector<5x20xf32>
    %3 = tpu.matmul %0, %2, %cst {dimension_numbers = #tpu.dot_dimension_numbers<[1], [0], [0], [1], [0, 0, 1, 1], [], []>} : vector<5x20xf32>, vector<20x20xf32>, vector<5x20xf32> -> vector<5x20xf32>
    %c0_4 = arith.constant 0 : index
    %c0_5 = arith.constant 0 : index
    %4 = vector.load %arg2[%c0_4, %c0_5] : memref<1x20xf32, #tpu.memory_space<vmem>>, vector<1x20xf32>
    %5 = vector.broadcast %4 : vector<1x20xf32> to vector<5x20xf32>
    %6 = arith.addf %3, %5 : vector<5x20xf32>
    %c1 = arith.constant 1 : index
    %c0_6 = arith.constant 0 : index
    %c0_7 = arith.constant 0 : index
    %7 = vector.load %arg1[%c1, %c0_6, %c0_7] : memref<2x20x20xf32, #tpu.memory_space<vmem>>, vector<1x20x20xf32>
    %8 = vector.shape_cast %7 : vector<1x20x20xf32> to vector<20x20xf32>
    %cst_8 = arith.constant dense<0.000000e+00> : vector<5x20xf32>
    %9 = tpu.matmul %6, %8, %cst_8 {dimension_numbers = #tpu.dot_dimension_numbers<[1], [0], [0], [1], [0, 0, 1, 1], [], []>} : vector<5x20xf32>, vector<20x20xf32>, vector<5x20xf32> -> vector<5x20xf32>
    %10 = vector.extract_strided_slice %9 {offsets = [0, 0], sizes = [5, 10], strides = [1, 1]} : vector<5x20xf32> to vector<5x10xf32>
    %c0_9 = arith.constant 0 : index
    %c0_10 = arith.constant 0 : index
    %11 = vector.load %arg3[%c0_9, %c0_10] : memref<5x10xf32, #tpu.memory_space<vmem>>, vector<5x10xf32>
    tpu.vector_store %arg3[%c0_9, %c0_10], %10 {strides = array<i32>} : memref<5x10xf32, #tpu.memory_space<vmem>>, vector<5x10xf32>,
    return
  }
}

</mosaic_0001>

<llo_original>
// kernel: tpu_custom_call.1
$region0: #{tpu_custom_call.1}
  #allocation0 [shape = 'u32[]', space=smem, size = 0x4, offset = 0x4, fixed_abs, tag = 'smem constant byte address 0x4 - core index']
  #allocation1 [shape = 'u32[72,128]{1,0:T(1,128)}', space=vmem, size = 0x9000, scoped, tag = 'internal scratch']
  %s0 = inlined_call_operand.vmem [shape: f32[5,20], index: 0, kind: input, shape index: {}]
  %s1 = inlined_call_operand.vmem [shape: f32[2,20,20], index: 1, kind: input, shape index: {}]
  %s2 = inlined_call_operand.vmem [shape: f32[1,20], index: 2, kind: input, shape index: {}]
  %s3 = inlined_call_operand.hbm [shape: f32[5,10], index: 3, kind: output, shape index: {}]
  %s4 = sld [smem:[#allocation0]]
  $region22: #{tpu_custom_call.1} parent=0
    _
  %s6 = ssub.s32 1, %s4
  %s7 = scalar_select 0, %s6, %s4
  $region1: #{tpu_custom_call.1} parent=0
    #allocation2 [shape = 'u8[4096]{0}', space=vmem, size = 0x1000, scoped, tag = 'output window, operand 0, single buffered']
    #allocation3 [shape = 's32[1]{0}', space=sflag, size = 0x4, scoped, tag = 'scoped memory for tpu_custom_call.1']
    %8 = vsyncpa [#allocation3], 0
    // Predicated region
    $region2: #{tpu_custom_call.1} parent=1 // pred_check
      _
    $region3: #{tpu_custom_call.1} parent=1 // pred_check_branch
      %10 = sbr.rel (0) target = $region5
    $region4: #{tpu_custom_call.1} parent=1 // pred_region
      _
    $region5: #{tpu_custom_call.1} parent=1 // pred_fallthru
      _
    // Predicated region
    $region6: #{tpu_custom_call.1} parent=1 // pred_check
      _
    $region7: #{tpu_custom_call.1} parent=1 // pred_check_branch
      %12 = sbr.rel (0) target = $region9
    $region8: #{tpu_custom_call.1} parent=1 // pred_region
      _
    $region9: #{tpu_custom_call.1} parent=1 // pred_fallthru
      _
    // Predicated region
    $region10: #{tpu_custom_call.1} parent=1 // pred_check
      _
    $region11: #{tpu_custom_call.1} parent=1 // pred_check_branch
      %14 = sbr.rel (0) target = $region13
    $region12: #{tpu_custom_call.1} parent=1 // pred_region
      _
    $region13: #{tpu_custom_call.1} parent=1 // pred_fallthru
      _
    %v15 = vld [vmem:[%s0] sm:$0x1f]
    %v16 = vld [vmem:[%s1] sm:$0xff]
    %v17 = vld [vmem:[%s1 + $0x8] sm:$0xff]
    %v18 = vld [vmem:[%s1 + $0x10] sm:$0xf]
    %v19 = vld [vmem:[%s2] sm:$0x1]
    %v21 = vperm.slane %v19, 0
    %vm23 = vcmask 162816
    %v25 = vsel %vm23, %v15, 0
    %vm27 = vcmask 1043456
    %v29 = vsel %vm27, %v18, 0
    %31 = vmatpush.msra.mxu0 0.0
    %32 = vmatpush.msra.mxu0 0.0
    %33 = vmatpush.msra.mxu0 0.0
    %34 = vmatpush.msra.mxu0 0.0
    %35 = vmatpush.msra.mxu0 0.0
    %36 = vmatpush.msra.mxu0 0.0
    %37 = vmatpush.msra.mxu0 0.0
    %38 = vmatpush.msra.mxu0 0.0
    %39 = vmatpush.msra.mxu0 0.0
    %40 = vmatpush.msra.mxu0 0.0
    %41 = vmatpush.msra.mxu0 0.0
    %42 = vmatpush.msra.mxu0 0.0
    %43 = vmatpush.msra.mxu0 0.0
    %44 = vmatpush.msra.mxu0 %v29
    %45 = vmatpush.msra.mxu0 %v17
    %46 = vmatpush.msra.mxu0 %v16
    %47 = vmatmul.f32.gmra.mxu0 %v25
    %v48 = vpop.f32.mrf.mxu0
    %v49 = vadd.f32 %v21, %v48
    %50 = vdwg.mxu0
    %s51 = scalar_lea.vmem %s1, 24
    %v52 = vld [vmem:[%s51] sm:$0xff]
    %v53 = vld [vmem:[%s51 + $0x8] sm:$0xff]
    %v54 = vld [vmem:[%s51 + $0x10] sm:$0xf]
    %v56 = vsel %vm23, %v49, 0
    %v59 = vsel %vm27, %v54, 0
    %61 = vmatpush.msra.mxu0 0.0
    %62 = vmatpush.msra.mxu0 0.0
    %63 = vmatpush.msra.mxu0 0.0
    %64 = vmatpush.msra.mxu0 0.0
    %65 = vmatpush.msra.mxu0 0.0
    %66 = vmatpush.msra.mxu0 0.0
    %67 = vmatpush.msra.mxu0 0.0
    %68 = vmatpush.msra.mxu0 0.0
    %69 = vmatpush.msra.mxu0 0.0
    %70 = vmatpush.msra.mxu0 0.0
    %71 = vmatpush.msra.mxu0 0.0
    %72 = vmatpush.msra.mxu0 0.0
    %73 = vmatpush.msra.mxu0 0.0
    %74 = vmatpush.msra.mxu0 %v59
    %75 = vmatpush.msra.mxu0 %v53
    %76 = vmatpush.msra.mxu0 %v52
    %77 = vmatmul.f32.gmra.mxu0 %v56
    %v78 = vpop.f32.mrf.mxu0
    %v79 = vadd.f32 0.0, %v78
    %80 = vdwg.mxu0
    %vm81 = vcmask 77824
    %82 = vst.msk [vmem:[#allocation2] sm:$0x1f] %vm81, %v79
    // Predicated region
    $region14: #{tpu_custom_call.1} parent=1 // pred_check
      _
    $region15: #{tpu_custom_call.1} parent=1 // pred_check_branch
      %84 = sbr.rel (0) target = $region17
    $region16: #{tpu_custom_call.1} parent=1 // pred_region
      %86 = vsyncadd [#allocation3], 0
      %s88 = sshll.u32 [#allocation2], 4
      %s89 = int_to_ptr.vmem [resolvable:$true] %s88
      %s90 = sshll.u32 %s3, 4
      %s91 = int_to_ptr.hbm [resolvable:$true] %s90
      %93 = dma.vmem_to_hbm [thread:$0]  %s89, 128, %s91, [#allocation3]
    $region17: #{tpu_custom_call.1} parent=1 // pred_fallthru
      _
    // Predicated region
    $region18: #{tpu_custom_call.1} parent=1 // pred_check
      _
    $region19: #{tpu_custom_call.1} parent=1 // pred_check_branch
      %95 = sbr.rel (0) target = $region21
    $region20: #{tpu_custom_call.1} parent=1 // pred_region
      %97 = dma.done [#allocation3], 128
    $region21: #{tpu_custom_call.1} parent=1 // pred_fallthru
      _
    %98 = vsyncpa [#allocation3], 1

</llo_original>
